<compile_context>
chip_gen: v7x
topology: tpu7x:2x2x1
jax: 0.10.0
libtpu: 0.0.40
codegen_flags: <defaults>
</compile_context>

<pallas_src>
import jax
import jax.numpy as jnp
import numpy as np
from jax.experimental import pallas as pl
from jax.experimental.pallas import tpu as pltpu

# ---- "args" (deterministic, small) -------------------------------------
GNN_INPUT = 8        # args.gnn_input
GT_LAYERS = 2        # args.gt_layers
ATT_D_MODEL = 32     # args.att_d_model (hidden_channels)
GNN_OUTPUT = 16      # args.gnn_output
DROPOUT_P = 0.1      # args.dropout (module evaluated with training=False -> identity)
# args.conv_type == 'sage', args.graph_pooling == 'mean', args.graph_unsup == True

# ---- problem / tiling geometry ------------------------------------------
N_NODES = 16                  # nodes per graph-batch (two 8-node ring graphs)
N_GRAPHS = 2                  # graphs per graph-batch
LANE = 128                    # TPU lane width; all channel dims padded to this
STACK = 8                     # graph-batches stacked per grid step -> 128 LHS rows
SN = STACK * N_NODES          # node rows per grid step (128)
GS = STACK * N_GRAPHS         # pooled rows per grid step (16, full sublane groups)
B_TOTAL = 32                  # total graph-batches in this demo
N_STEPS = B_TOTAL // STACK    # grid size (4)
ONES_LANE = 64                # constant-1 carrier lane in x and in h (bias routing)


# ------------------------------------------------------------------------
# Kernel (one grid step = STACK graph-batches fused end to end)
# ------------------------------------------------------------------------
def graphsage_kernel(x_ref, a_ref, p_ref, w1_ref, w2_ref, out_ref):
    """Fused 2-layer SAGEConv + ReLU + global mean pool for one node-row stack.

    x_ref  : (SN, LANE)   features in lanes [0:GNN_INPUT]; lane ONES_LANE == 1
    a_ref  : (SN, SN)     block-diagonal row-normalized adjacency for this stack
    p_ref  : (GS, SN)     block-diagonal mean-pool matrix for this stack
    w1_ref : (LANE, LANE) fused layer-1 weight (agg rows 0:8, x rows 8:16, bias row 72)
    w2_ref : (LANE, LANE) fused layer-2 weight (agg rows 0:32, h rows 32:64, bias row 96)
    out_ref: (GS, LANE)   lane-dense pooled output slab
    """
    x = x_ref[...]
    a = a_ref[...]

    # ---- SAGEConv layer 1: relu(lin_l(A @ x) + lin_r(x) + b1) as ONE 128-wide matmul.
    # Pack [agg | x] into one 128-lane slab: agg keeps lanes 0:8, x is rolled to
    # lanes 8:16 (its ones carrier moves 64 -> 72, the bias row of W1).  The roll
    # lands on the idle XLU slot.
    agg1 = jnp.dot(a, x, preferred_element_type=jnp.float32)              # (SN, LANE)
    z1 = agg1 + pltpu.roll(x, GNN_INPUT, 1)
    h = jnp.maximum(
        jnp.dot(z1, w1_ref[...], preferred_element_type=jnp.float32), 0.0)
    # dropout(p, training=False) -> identity
    # h: features in lanes [0:ATT_D_MODEL], ones carrier at lane ONES_LANE (relu(1)=1).

    # ---- SAGEConv layer 2 (last conv: no activation / dropout), same packing:
    # agg2 keeps lanes 0:32, h is rolled to lanes 32:64 (ones carrier 64 -> 96).
    agg2 = jnp.dot(a, h, preferred_element_type=jnp.float32)              # (SN, LANE)
    z2 = agg2 + pltpu.roll(h, ATT_D_MODEL, 1)
    h2 = jnp.dot(z2, w2_ref[...], preferred_element_type=jnp.float32)     # (SN, LANE)

    # ---- global_mean_pool(x, batch)  (graph_unsup=True, pooling='mean')
    out_ref[...] = jnp.dot(p_ref[...], h2, preferred_element_type=jnp.float32)


# ------------------------------------------------------------------------
# Wrapper
# ------------------------------------------------------------------------
def graphsage_forward(x_all, a_all, p_all, w1, w2):
    """x_all: (N_STEPS*SN, LANE), a_all: (N_STEPS*SN, SN), p_all: (N_STEPS*GS, SN)."""
    n_steps = x_all.shape[0] // SN
    out_rows = n_steps * GS

    flops = n_steps * (2 * SN * SN * LANE        # A @ x
                       + 2 * SN * LANE * LANE    # z1 @ W1
                       + 2 * SN * SN * LANE      # A @ h
                       + 2 * SN * LANE * LANE    # z2 @ W2
                       + 2 * GS * SN * LANE)     # P @ h2
    operands = (x_all, a_all, p_all, w1, w2)
    bytes_accessed = (sum(int(o.size) * o.dtype.itemsize for o in operands)
                      + out_rows * LANE * 4)

    padded_out = pl.pallas_call(
        graphsage_kernel,
        out_shape=jax.ShapeDtypeStruct((out_rows, LANE), jnp.float32),
        grid_spec=pltpu.PrefetchScalarGridSpec(
            num_scalar_prefetch=0,
            grid=(n_steps,),
            in_specs=[
                pl.BlockSpec((SN, LANE), lambda i: (i, 0)),     # node features (per step)
                pl.BlockSpec((SN, SN), lambda i: (i, 0)),       # block-diag adjacency
                pl.BlockSpec((GS, SN), lambda i: (i, 0)),       # block-diag pool matrix
                pl.BlockSpec((LANE, LANE), lambda i: (0, 0)),   # W1: VMEM-resident
                pl.BlockSpec((LANE, LANE), lambda i: (0, 0)),   # W2: VMEM-resident
            ],
            out_specs=pl.BlockSpec((GS, LANE), lambda i: (i, 0)),
        ),
        compiler_params=pltpu.CompilerParams(
            # independent graph-batch stacks: shards across v7x's two TensorCores
            dimension_semantics=("parallel",),
            vmem_limit_bytes=32 * 1024 * 1024,
        ),
        cost_estimate=pl.CostEstimate(flops=flops, transcendentals=0,
                                      bytes_accessed=bytes_accessed),
    )(*operands)
    # strip lane padding (rows are all real: GS is a whole number of sublane groups)
    return padded_out[:, :GNN_OUTPUT]


# ------------------------------------------------------------------------
# Host-side glue: padding, weight fusion, graph matrices
# ------------------------------------------------------------------------
def pad_node_features(x):
    """(R, GNN_INPUT) -> (R, LANE): features in lanes [0:GNN_INPUT], ones at ONES_LANE."""
    xp = jnp.zeros((x.shape[0], LANE), jnp.float32)
    xp = xp.at[:, :GNN_INPUT].set(x)
    xp = xp.at[:, ONES_LANE].set(1.0)
    return xp


def pack_params(params):
    """Pre-transpose + fuse (lin_l, lin_r, bias) per SAGEConv into one (128,128) weight."""
    wl1, bl1, wr1, wl2, bl2, wr2 = params   # torch layout: W (out, in), b (out,)

    # layer 1: h = relu([agg | roll(x)] @ W1)
    #   rows 0:8   <- lin_l (agg lanes), rows 8:16 <- lin_r (x rolled by 8),
    #   row 72 (= ONES_LANE + 8, x's rolled ones lane) <- bias, also carries the
    #   ones into h's lane ONES_LANE for layer 2's bias.
    w1 = jnp.zeros((LANE, LANE), jnp.float32)
    w1 = w1.at[:GNN_INPUT, :ATT_D_MODEL].set(wl1.T)
    w1 = w1.at[GNN_INPUT:2 * GNN_INPUT, :ATT_D_MODEL].set(wr1.T)
    w1 = w1.at[ONES_LANE + GNN_INPUT, :ATT_D_MODEL].set(bl1)
    w1 = w1.at[ONES_LANE + GNN_INPUT, ONES_LANE].set(1.0)

    # layer 2: h2 = [agg2 | roll(h)] @ W2
    #   rows 0:32 <- lin_l (agg2 lanes), rows 32:64 <- lin_r (h rolled by 32),
    #   row 96 (= ONES_LANE + 32, h's rolled ones lane) <- bias.
    w2 = jnp.zeros((LANE, LANE), jnp.float32)
    w2 = w2.at[:ATT_D_MODEL, :GNN_OUTPUT].set(wl2.T)
    w2 = w2.at[ATT_D_MODEL:2 * ATT_D_MODEL, :GNN_OUTPUT].set(wr2.T)
    w2 = w2.at[ONES_LANE + ATT_D_MODEL, :GNN_OUTPUT].set(bl2)
    return w1, w2


def build_dense_adjacency(edge_index, num_nodes):
    """A[i, j] = 1/deg(i) for edge j -> i (PyG mean aggregation at target)."""
    src, dst = edge_index[0], edge_index[1]
    counts = jnp.zeros((num_nodes, num_nodes), jnp.float32).at[dst, src].add(1.0)
    deg = counts.sum(axis=1, keepdims=True)
    return counts / jnp.maximum(deg, 1.0)


def build_mean_pool_matrix(batch, num_graphs):
    """(num_graphs, N) with P[g, i] = 1/|g|."""
    onehot = (jnp.arange(num_graphs)[:, None] == batch[None, :]).astype(jnp.float32)
    cnt = onehot.sum(axis=1, keepdims=True)
    return onehot / jnp.maximum(cnt, 1.0)


def init_params(key):
    """Deterministic Kaiming-uniform-ish init matching torch Linear shapes."""
    ks = jax.random.split(key, 6)

    def lin_w(k, out_c, in_c):
        bound = 1.0 / np.sqrt(in_c)
        return jax.random.uniform(k, (out_c, in_c), jnp.float32, -bound, bound)

    def lin_b(k, out_c, in_c):
        bound = 1.0 / np.sqrt(in_c)
        return jax.random.uniform(k, (out_c,), jnp.float32, -bound, bound)

    # layer 1: SAGEConv(GNN_INPUT -> ATT_D_MODEL): lin_l has bias, lin_r has none
    wl1 = lin_w(ks[0], ATT_D_MODEL, GNN_INPUT)
    bl1 = lin_b(ks[1], ATT_D_MODEL, GNN_INPUT)
    wr1 = lin_w(ks[2], ATT_D_MODEL, GNN_INPUT)
    # layer 2: SAGEConv(ATT_D_MODEL -> GNN_OUTPUT)
    wl2 = lin_w(ks[3], GNN_OUTPUT, ATT_D_MODEL)
    bl2 = lin_b(ks[4], GNN_OUTPUT, ATT_D_MODEL)
    wr2 = lin_w(ks[5], GNN_OUTPUT, ATT_D_MODEL)
    return (wl1, bl1, wr1, wl2, bl2, wr2)


def reference_forward(x, A, P, params):
    wl1, bl1, wr1, wl2, bl2, wr2 = params
    h = jnp.maximum(A @ x @ wl1.T + bl1 + x @ wr1.T, 0.0)
    h2 = A @ h @ wl2.T + bl2 + h @ wr2.T
    return P @ h2


# TODO(synk): the non-graph_unsup branch (unbatch + per-graph `lp`-dependent node
# selection) is data-dependent Python control flow with no clean Pallas mapping;
# only the graph_unsup=True (global mean pool) path is implemented.  The
# `projection` head (fc1/fc2 + elu) is not part of forward() and is omitted.
# TODO(synk): the dense N x N adjacency is only viable at small N; real graph
# sizes need a (node_tile, neighbor_tile) BlockSpec accumulation or a
# scalar-prefetch CSR/gather aggregation path (A exceeds scoped VMEM near N~3k).

if __name__ == "__main__":
    key = jax.random.PRNGKey(0)
    k_x, k_p = jax.random.split(key)

    # node features for every graph-batch
    x_raw = jax.random.normal(k_x, (B_TOTAL, N_NODES, GNN_INPUT), jnp.float32)

    # one graph-batch = two 8-node ring graphs (bidirectional), batch = [0]*8 + [1]*8
    src, dst = [], []
    for g in range(N_GRAPHS):
        base = g * 8
        for i in range(8):
            a, b = base + i, base + (i + 1) % 8
            src += [a, b]
            dst += [b, a]
    edge_index = jnp.array([src, dst], dtype=jnp.int32)
    batch = jnp.array([0] * 8 + [1] * 8, dtype=jnp.int32)

    A_gb = build_dense_adjacency(edge_index, N_NODES)        # (16, 16)
    P_gb = build_mean_pool_matrix(batch, N_GRAPHS)            # (2, 16)
    params = init_params(k_p)

    # host-side assembly: per-step block-diagonal adjacency / pooling, padded features
    A_step = jnp.kron(jnp.eye(STACK, dtype=jnp.float32), A_gb)    # (SN, SN)
    P_step = jnp.kron(jnp.eye(STACK, dtype=jnp.float32), P_gb)    # (GS, SN)
    A_all = jnp.tile(A_step, (N_STEPS, 1))                        # (N_STEPS*SN, SN)
    P_all = jnp.tile(P_step, (N_STEPS, 1))                        # (N_STEPS*GS, SN)
    x_all = pad_node_features(x_raw.reshape(B_TOTAL * N_NODES, GNN_INPUT))
    W1, W2 = pack_params(params)                                  # fused, (128,128) each

    out = graphsage_forward(x_all, A_all, P_all, W1, W2)          # (B_TOTAL*N_GRAPHS, GNN_OUTPUT)
    out = jax.block_until_ready(out)

    ref = jax.vmap(lambda xb: reference_forward(xb, A_gb, P_gb, params))(x_raw)
    ref = ref.reshape(B_TOTAL * N_GRAPHS, GNN_OUTPUT)
    np.testing.assert_allclose(np.asarray(out), np.asarray(ref), rtol=1e-5, atol=1e-5)

    print("KERNEL_OK")
</pallas_src>

<mosaic_0001>
module attributes {stable_mosaic.version = 11 : i64} {
  func.func @graphsage_kernel(%arg0: i32, %arg1: memref<128x128xf32, #tpu.memory_space<vmem>>, %arg2: memref<128x128xf32, #tpu.memory_space<vmem>>, %arg3: memref<16x128xf32, #tpu.memory_space<vmem>>, %arg4: memref<128x128xf32, #tpu.memory_space<vmem>>, %arg5: memref<128x128xf32, #tpu.memory_space<vmem>>, %arg6: memref<16x128xf32, #tpu.memory_space<vmem>>) attributes {dimension_semantics = [#tpu.dimension_semantics<parallel>], iteration_bounds = array<i64: 4>, scalar_prefetch = 0 : i64, scratch_operands = 0 : i64, tpu.core_type = #tpu.core_type<tc>, window_params = [{transform_indices = @transform_0, window_bounds = array<i64: 128, 128>}, {transform_indices = @transform_1, window_bounds = array<i64: 128, 128>}, {transform_indices = @transform_2, window_bounds = array<i64: 16, 128>}, {pipeline_mode = #tpu.pipeline_mode<synchronous>, transform_indices = @transform_3, window_bounds = array<i64: 128, 128>}, {pipeline_mode = #tpu.pipeline_mode<synchronous>, transform_indices = @transform_4, window_bounds = array<i64: 128, 128>}, {transform_indices = @transform_5, window_bounds = array<i64: 16, 128>}]} {
    %c0 = arith.constant 0 : index
    %c0_0 = arith.constant 0 : index
    %0 = vector.load %arg1[%c0, %c0_0] : memref<128x128xf32, #tpu.memory_space<vmem>>, vector<128x128xf32>
    %c0_1 = arith.constant 0 : index
    %c0_2 = arith.constant 0 : index
    %1 = vector.load %arg2[%c0_1, %c0_2] : memref<128x128xf32, #tpu.memory_space<vmem>>, vector<128x128xf32>
    %cst = arith.constant dense<0.000000e+00> : vector<128x128xf32>
    %2 = tpu.matmul %1, %0, %cst {dimension_numbers = #tpu.dot_dimension_numbers<[1], [0], [0], [1], [0, 0, 1, 1], [], []>} : vector<128x128xf32>, vector<128x128xf32>, vector<128x128xf32> -> vector<128x128xf32>
    %c8_i32 = arith.constant 8 : i32
    %3 = tpu.dynamic_rotate %0 by %c8_i32 dim 1 : vector<128x128xf32>, i32 -> vector<128x128xf32>
    %4 = arith.addf %2, %3 : vector<128x128xf32>
    %c0_3 = arith.constant 0 : index
    %c0_4 = arith.constant 0 : index
    %5 = vector.load %arg4[%c0_3, %c0_4] : memref<128x128xf32, #tpu.memory_space<vmem>>, vector<128x128xf32>
    %cst_5 = arith.constant dense<0.000000e+00> : vector<128x128xf32>
    %6 = tpu.matmul %4, %5, %cst_5 {dimension_numbers = #tpu.dot_dimension_numbers<[1], [0], [0], [1], [0, 0, 1, 1], [], []>} : vector<128x128xf32>, vector<128x128xf32>, vector<128x128xf32> -> vector<128x128xf32>
    %cst_6 = arith.constant 0.000000e+00 : f32
    %7 = vector.broadcast %cst_6 : f32 to vector<128x128xf32>
    %8 = arith.maximumf %6, %7 : vector<128x128xf32>
    %cst_7 = arith.constant dense<0.000000e+00> : vector<128x128xf32>
    %9 = tpu.matmul %1, %8, %cst_7 {dimension_numbers = #tpu.dot_dimension_numbers<[1], [0], [0], [1], [0, 0, 1, 1], [], []>} : vector<128x128xf32>, vector<128x128xf32>, vector<128x128xf32> -> vector<128x128xf32>
    %c32_i32 = arith.constant 32 : i32
    %10 = tpu.dynamic_rotate %8 by %c32_i32 dim 1 : vector<128x128xf32>, i32 -> vector<128x128xf32>
    %11 = arith.addf %9, %10 : vector<128x128xf32>
    %c0_8 = arith.constant 0 : index
    %c0_9 = arith.constant 0 : index
    %12 = vector.load %arg5[%c0_8, %c0_9] : memref<128x128xf32, #tpu.memory_space<vmem>>, vector<128x128xf32>
    %cst_10 = arith.constant dense<0.000000e+00> : vector<128x128xf32>
    %13 = tpu.matmul %11, %12, %cst_10 {dimension_numbers = #tpu.dot_dimension_numbers<[1], [0], [0], [1], [0, 0, 1, 1], [], []>} : vector<128x128xf32>, vector<128x128xf32>, vector<128x128xf32> -> vector<128x128xf32>
    %c0_11 = arith.constant 0 : index
    %c0_12 = arith.constant 0 : index
    %14 = vector.load %arg3[%c0_11, %c0_12] : memref<16x128xf32, #tpu.memory_space<vmem>>, vector<16x128xf32>
    %cst_13 = arith.constant dense<0.000000e+00> : vector<16x128xf32>
    %15 = tpu.matmul %14, %13, %cst_13 {dimension_numbers = #tpu.dot_dimension_numbers<[1], [0], [0], [1], [0, 0, 1, 1], [], []>} : vector<16x128xf32>, vector<128x128xf32>, vector<16x128xf32> -> vector<16x128xf32>
    %c0_14 = arith.constant 0 : index
    %c0_15 = arith.constant 0 : index
    %16 = vector.load %arg6[%c0_14, %c0_15] : memref<16x128xf32, #tpu.memory_space<vmem>>, vector<16x128xf32>
    tpu.vector_store %arg6[%c0_14, %c0_15], %15 {strides = array<i32>} : memref<16x128xf32, #tpu.memory_space<vmem>>, vector<16x128xf32>,
    return
  }
  func.func @transform_0(%arg0: i32) -> (i32, i32) {
    %c0_i32 = arith.constant 0 : i32
    %c0_i32_0 = arith.constant 0 : i32
    return %arg0, %c0_i32 : i32, i32
  }
  func.func @transform_1(%arg0: i32) -> (i32, i32) {
    %c0_i32 = arith.constant 0 : i32
    %c0_i32_0 = arith.constant 0 : i32
    return %arg0, %c0_i32 : i32, i32
  }
  func.func @transform_2(%arg0: i32) -> (i32, i32) {
    %c0_i32 = arith.constant 0 : i32
    %c0_i32_0 = arith.constant 0 : i32
    return %arg0, %c0_i32 : i32, i32
  }
  func.func @transform_3(%arg0: i32) -> (i32, i32) {
    %c0_i32 = arith.constant 0 : i32
    %c0_i32_0 = arith.constant 0 : i32
    %c0_i32_1 = arith.constant 0 : i32
    return %c0_i32, %c0_i32_0 : i32, i32
  }
  func.func @transform_4(%arg0: i32) -> (i32, i32) {
    %c0_i32 = arith.constant 0 : i32
    %c0_i32_0 = arith.constant 0 : i32
    %c0_i32_1 = arith.constant 0 : i32
    return %c0_i32, %c0_i32_0 : i32, i32
  }
  func.func @transform_5(%arg0: i32) -> (i32, i32) {
    %c0_i32 = arith.constant 0 : i32
    %c0_i32_0 = arith.constant 0 : i32
    return %arg0, %c0_i32 : i32, i32
  }
}

</mosaic_0001>

<llo_original>
// kernel: tpu_custom_call.1
$region0: #{tpu_custom_call.1}
  #allocation0 [shape = 'u32[]', space=smem, size = 0x4, offset = 0x4, fixed_abs, tag = 'smem constant byte address 0x4 - core index']
  #allocation1 [shape = 'u32[144,128]{1,0:T(1,128)}', space=vmem, size = 0x12000, scoped, tag = 'internal scratch']
  %s0 = inlined_call_operand.hbm [shape: f32[512,128], index: 0, kind: input, shape index: {}]
  %s1 = inlined_call_operand.hbm [shape: f32[512,128], index: 1, kind: input, shape index: {}]
  %s2 = inlined_call_operand.hbm [shape: f32[64,128], index: 2, kind: input, shape index: {}]
  %s3 = inlined_call_operand.hbm [shape: f32[128,128], index: 3, kind: input, shape index: {}]
  %s4 = inlined_call_operand.hbm [shape: f32[128,128], index: 4, kind: input, shape index: {}]
  %s5 = inlined_call_operand.hbm [shape: f32[64,128], index: 5, kind: output, shape index: {}]
  %s6 = sld [smem:[#allocation0]]
  $region73: #{tpu_custom_call.1} parent=0
    _
  %s8 = ssub.s32 1, %s6
  %s9 = scalar_select 0, %s8, %s6
  $region1: #{tpu_custom_call.1} parent=0
    #allocation2 [shape = 'u8[131072]{0}', space=vmem, size = 0x20000, scoped, tag = 'input window, operand 0']
    #allocation3 [shape = 's32[2]{0}', space=sflag, size = 0x8, scoped, tag = 'scoped memory for tpu_custom_call.1']
    #allocation4 [shape = 's32[2]{0}', space=sflag, size = 0x8, scoped, tag = 'scoped memory for tpu_custom_call.1']
    #allocation5 [shape = 'u8[131072]{0}', space=vmem, size = 0x20000, scoped, tag = 'input window, operand 1']
    #allocation6 [shape = 's32[2]{0}', space=sflag, size = 0x8, scoped, tag = 'scoped memory for tpu_custom_call.1']
    #allocation7 [shape = 'u8[16384]{0}', space=vmem, size = 0x4000, scoped, tag = 'input window, operand 2']
    #allocation8 [shape = 'u8[65536]{0}', space=vmem, size = 0x10000, scoped, tag = 'input window, operand 3, single buffered']
    #allocation9 [shape = 's32[1]{0}', space=sflag, size = 0x4, scoped, tag = 'scoped memory for tpu_custom_call.1']
    #allocation10 [shape = 'u8[65536]{0}', space=vmem, size = 0x10000, scoped, tag = 'input window, operand 4, single buffered']
    #allocation11 [shape = 'u8[16384]{0}', space=vmem, size = 0x4000, scoped, tag = 'output window, operand 0']
    %10 = vsyncpa [#allocation3], 0
    %s11 = scalar_lea.sflag [#allocation3], 1
    %12 = vsyncpa %s11, 0
    %13 = vsyncpa [#allocation6], 0
    %s14 = scalar_lea.sflag [#allocation6], 1
    %15 = vsyncpa %s14, 0
    %16 = vsyncpa [#allocation9], 0
    %17 = vsyncpa [#allocation4], 0
    %s18 = scalar_lea.sflag [#allocation4], 1
    %19 = vsyncpa %s18, 0
    loop: start=0, step=1, limit=6
    $region2: #{tpu_custom_call.1} parent=1 // loop_pre_header
      _
    $region3: #{tpu_custom_call.1} parent=1 // loop_header
      %s21 = sphi 0, %s25
      %p22 = scmp.ge.s32.totalorder %s21, 6
      %s31 = sphi 0, %s33
      %s34 = sphi 0, %s31
      %s35 = sphi 0, %s34
      %s51 = sphi 0, %s35
      %s57 = sphi 0, %s59
      %s60 = sphi 0, %s57
      %s61 = sphi 0, %s60
      %s77 = sphi 0, %s61
      %s83 = sphi 0, %s85
      %s86 = sphi 0, %s83
      %s87 = sphi 0, %s86
      %s103 = sphi 0, %s87
      %s107 = sphi 0, %s107
      %s109 = sphi 0, %s107
      %s110 = sphi 0, %s109
      %s124 = sphi 0, %s110
      %s128 = sphi 0, %s128
      %s130 = sphi 0, %s128
      %s131 = sphi 0, %s130
      %s145 = sphi 0, %s131
      %s151 = sphi 0, %s153
      %s154 = sphi 0, %s151
      %s155 = sphi 0, %s154
      %s171 = sphi 0, %s155
    $region4: #{tpu_custom_call.1} parent=1 // loop_header_branch
      %24 = sbr.rel (%p22) target = $region8
    $region5: #{tpu_custom_call.1} parent=1 // loop_body
      %s26 = ssub.s32 %s21, 1
      %s27 = ssub.s32 %s21, 2
      %s28 = sadd.s32 %s21, 1
      %s29 = ssub.s32 %s21, %s28
      %p30 = scmp.eq.s32.totalorder %s29, 0
      %s32 = sadd.s32 %s31, 1
      %s33 = scalar_select %p30, %s31, %s32
      %p36 = pneg %p30
      %p37 = scmp.eq.s32.totalorder %s21, 3
      %p38 = por %p36, %p37
      %p39 = scmp.ne.s32.totalorder %s31, %s34
      %p40 = scmp.eq.s32.totalorder %s21, 0
      %p41 = por %p39, %p40
      %p42 = scmp.ne.s32.totalorder %s31, %s34
      %p43 = scmp.eq.s32.totalorder %s26, 3
      %p44 = por %p42, %p43
      %p45 = scmp.ne.s32.totalorder %s34, %s35
      %p46 = scmp.eq.s32.totalorder %s26, 0
      %p47 = por %p45, %p46
      %p48 = scmp.ne.s32.totalorder %s34, %s35
      %p49 = scmp.eq.s32.totalorder %s27, 3
      %p50 = por %p48, %p49
      %p52 = scmp.ne.s32.totalorder %s35, %s51
      %p53 = scmp.eq.s32.totalorder %s27, 0
      %p54 = por %p52, %p53
      %s55 = ssub.s32 %s21, %s28
      %p56 = scmp.eq.s32.totalorder %s55, 0
      %s58 = sadd.s32 %s57, 1
      %s59 = scalar_select %p56, %s57, %s58
      %p62 = pneg %p56
      %p63 = scmp.eq.s32.totalorder %s21, 3
      %p64 = por %p62, %p63
      %p65 = scmp.ne.s32.totalorder %s57, %s60
      %p66 = scmp.eq.s32.totalorder %s21, 0
      %p67 = por %p65, %p66
      %p68 = scmp.ne.s32.totalorder %s57, %s60
      %p69 = scmp.eq.s32.totalorder %s26, 3
      %p70 = por %p68, %p69
      %p71 = scmp.ne.s32.totalorder %s60, %s61
      %p72 = scmp.eq.s32.totalorder %s26, 0
      %p73 = por %p71, %p72
      %p74 = scmp.ne.s32.totalorder %s60, %s61
      %p75 = scmp.eq.s32.totalorder %s27, 3
      %p76 = por %p74, %p75
      %p78 = scmp.ne.s32.totalorder %s61, %s77
      %p79 = scmp.eq.s32.totalorder %s27, 0
      %p80 = por %p78, %p79
      %s81 = ssub.s32 %s21, %s28
      %p82 = scmp.eq.s32.totalorder %s81, 0
      %s84 = sadd.s32 %s83, 1
      %s85 = scalar_select %p82, %s83, %s84
      %p88 = pneg %p82
      %p89 = scmp.eq.s32.totalorder %s21, 3
      %p90 = por %p88, %p89
      %p91 = scmp.ne.s32.totalorder %s83, %s86
      %p92 = scmp.eq.s32.totalorder %s21, 0
      %p93 = por %p91, %p92
      %p94 = scmp.ne.s32.totalorder %s83, %s86
      %p95 = scmp.eq.s32.totalorder %s26, 3
      %p96 = por %p94, %p95
      %p97 = scmp.ne.s32.totalorder %s86, %s87
      %p98 = scmp.eq.s32.totalorder %s26, 0
      %p99 = por %p97, %p98
      %p100 = scmp.ne.s32.totalorder %s86, %s87
      %p101 = scmp.eq.s32.totalorder %s27, 3
      %p102 = por %p100, %p101
      %p104 = scmp.ne.s32.totalorder %s87, %s103
      %p105 = scmp.eq.s32.totalorder %s27, 0
      %p106 = por %p104, %p105
      %s108 = sadd.s32 %s107, 1
      %p111 = scmp.eq.s32.totalorder %s21, 3
      %p112 = scmp.ne.s32.totalorder %s107, %s109
      %p113 = scmp.eq.s32.totalorder %s21, 0
      %p114 = por %p112, %p113
      %p115 = scmp.ne.s32.totalorder %s107, %s109
      %p116 = scmp.eq.s32.totalorder %s26, 3
      %p117 = por %p115, %p116
      %p118 = scmp.ne.s32.totalorder %s109, %s110
      %p119 = scmp.eq.s32.totalorder %s26, 0
      %p120 = por %p118, %p119
      %p121 = scmp.ne.s32.totalorder %s109, %s110
      %p122 = scmp.eq.s32.totalorder %s27, 3
      %p123 = por %p121, %p122
      %p125 = scmp.ne.s32.totalorder %s110, %s124
      %p126 = scmp.eq.s32.totalorder %s27, 0
      %p127 = por %p125, %p126
      %s129 = sadd.s32 %s128, 1
      %p132 = scmp.eq.s32.totalorder %s21, 3
      %p133 = scmp.ne.s32.totalorder %s128, %s130
      %p134 = scmp.eq.s32.totalorder %s21, 0
      %p135 = por %p133, %p134
      %p136 = scmp.ne.s32.totalorder %s128, %s130
      %p137 = scmp.eq.s32.totalorder %s26, 3
      %p138 = por %p136, %p137
      %p139 = scmp.ne.s32.totalorder %s130, %s131
      %p140 = scmp.eq.s32.totalorder %s26, 0
      %p141 = por %p139, %p140
      %p142 = scmp.ne.s32.totalorder %s130, %s131
      %p143 = scmp.eq.s32.totalorder %s27, 3
      %p144 = por %p142, %p143
      %p146 = scmp.ne.s32.totalorder %s131, %s145
      %p147 = scmp.eq.s32.totalorder %s27, 0
      %p148 = por %p146, %p147
      %s149 = ssub.s32 %s21, %s28
      %p150 = scmp.eq.s32.totalorder %s149, 0
      %s152 = sadd.s32 %s151, 1
      %s153 = scalar_select %p150, %s151, %s152
      %p156 = pneg %p150
      %p157 = scmp.eq.s32.totalorder %s21, 3
      %p158 = por %p156, %p157
      %p159 = scmp.ne.s32.totalorder %s151, %s154
      %p160 = scmp.eq.s32.totalorder %s21, 0
      %p161 = por %p159, %p160
      %p162 = scmp.ne.s32.totalorder %s151, %s154
      %p163 = scmp.eq.s32.totalorder %s26, 3
      %p164 = por %p162, %p163
      %p165 = scmp.ne.s32.totalorder %s154, %s155
      %p166 = scmp.eq.s32.totalorder %s26, 0
      %p167 = por %p165, %p166
      %p168 = scmp.ne.s32.totalorder %s154, %s155
      %p169 = scmp.eq.s32.totalorder %s27, 3
      %p170 = por %p168, %p169
      %p172 = scmp.ne.s32.totalorder %s155, %s171
      %p173 = scmp.eq.s32.totalorder %s27, 0
      %p174 = por %p172, %p173
      %p175 = scmp.le.s32.totalorder 1, %s21
      %p176 = scmp.lt.s32.totalorder %s21, 5
      %p177 = pnand %p175, %p176
      %p178 = pneg %p177
      // Predicated region
      $region9: #{tpu_custom_call.1} parent=5 // pred_check
        _
      $region10: #{tpu_custom_call.1} parent=5 // pred_check_branch
        %180 = sbr.rel (%p177) target = $region12
      $region11: #{tpu_custom_call.1} parent=5 // pred_region
        %s181 = ssub.s32 %s21, 1
        // Predicated region
        $region13: #{tpu_custom_call.1} parent=11 // pred_check
          %p182 = pneg %p120
        $region14: #{tpu_custom_call.1} parent=11 // pred_check_branch
          %184 = sbr.rel (%p182) target = $region16
        $region15: #{tpu_custom_call.1} parent=11 // pred_region
          %s186 = ssub.s32 2048, 2048
          %187 = vsyncadd [#allocation9], %s186
          %s188 = sshll.u32 [#allocation8], 4
          %s189 = int_to_ptr.vmem [resolvable:$true] %s188
          %194 = dma.hbm_to_vmem [thread:$0]  %s3, 2048, %s189, [#allocation9], 128, 128, 8
        $region16: #{tpu_custom_call.1} parent=11 // pred_fallthru
          _
        // Predicated region
        $region17: #{tpu_custom_call.1} parent=11 // pred_check
          %p195 = pneg %p141
        $region18: #{tpu_custom_call.1} parent=11 // pred_check_branch
          %197 = sbr.rel (%p195) target = $region20
        $region19: #{tpu_custom_call.1} parent=11 // pred_region
          %s199 = ssub.s32 2048, 2048
          %200 = vsyncadd [#allocation9], %s199
          %s201 = sshll.u32 [#allocation10], 4
          %s202 = int_to_ptr.vmem [resolvable:$true] %s201
          %207 = dma.hbm_to_vmem [thread:$0]  %s4, 2048, %s202, [#allocation9], 128, 128, 8
        $region20: #{tpu_custom_call.1} parent=11 // pred_fallthru
          _
      $region12: #{tpu_custom_call.1} parent=5 // pred_fallthru
        _
      %p208 = scmp.lt.s32.totalorder %s21, 4
      // Predicated region
      $region21: #{tpu_custom_call.1} parent=5 // pred_check
        %p209 = pneg %p208
      $region22: #{tpu_custom_call.1} parent=5 // pred_check_branch
        %211 = sbr.rel (%p209) target = $region24
      $region23: #{tpu_custom_call.1} parent=5 // pred_region
        // Predicated region
        $region25: #{tpu_custom_call.1} parent=23 // pred_check
          %p212 = pneg %p41
        $region26: #{tpu_custom_call.1} parent=23 // pred_check_branch
          %214 = sbr.rel (%p212) target = $region28
        $region27: #{tpu_custom_call.1} parent=23 // pred_region
          %s215 = sand.u32 %s31, 1
          %s216 = scalar_lea.sflag [#allocation3], %s215
          %s217 = sand.u32 %s31, 1
          %s218 = smul.addr %s217, 128
          %s219 = scalar_lea.vmem [#allocation2], %s218
          %s220 = smul.u32 16, %s21
          %s222 = ssub.s32 2048, 2048
          %223 = vsyncadd %s216, %s222
          %s224 = smul.addr %s220, 128
          %s225 = scalar_lea.hbm %s0, %s224
          %s226 = sshll.u32 %s219, 4
          %s227 = int_to_ptr.vmem [resolvable:$true] %s226
          %232 = dma.hbm_to_vmem [thread:$0]  %s225, 2048, %s227, %s216, 128, 128, 8
        $region28: #{tpu_custom_call.1} parent=23 // pred_fallthru
          _
        // Predicated region
        $region29: #{tpu_custom_call.1} parent=23 // pred_check
          %p233 = pneg %p67
        $region30: #{tpu_custom_call.1} parent=23 // pred_check_branch
          %235 = sbr.rel (%p233) target = $region32
        $region31: #{tpu_custom_call.1} parent=23 // pred_region
          %s236 = sand.u32 %s21, 1
          %s237 = scalar_lea.sflag [#allocation6], %s236
          %s238 = sand.u32 %s57, 1
          %s239 = smul.addr %s238, 128
          %s240 = scalar_lea.vmem [#allocation5], %s239
          %s241 = smul.u32 16, %s21
          %s243 = ssub.s32 2048, 2048
          %244 = vsyncadd %s237, %s243
          %s245 = smul.addr %s241, 128
          %s246 = scalar_lea.hbm %s1, %s245
          %s247 = sshll.u32 %s240, 4
          %s248 = int_to_ptr.vmem [resolvable:$true] %s247
          %253 = dma.hbm_to_vmem [thread:$0]  %s246, 2048, %s248, %s237, 128, 128, 8
        $region32: #{tpu_custom_call.1} parent=23 // pred_fallthru
          _
        // Predicated region
        $region33: #{tpu_custom_call.1} parent=23 // pred_check
          %p254 = pneg %p93
        $region34: #{tpu_custom_call.1} parent=23 // pred_check_branch
          %256 = sbr.rel (%p254) target = $region36
        $region35: #{tpu_custom_call.1} parent=23 // pred_region
          %s257 = sand.u32 %s21, 1
          %s258 = scalar_lea.sflag [#allocation6], %s257
          %s259 = sand.u32 %s83, 1
          %s260 = smul.addr %s259, 16
          %s261 = scalar_lea.vmem [#allocation7], %s260
          %s262 = smul.u32 2, %s21
          %s264 = ssub.s32 256, 256
          %265 = vsyncadd %s258, %s264
          %s266 = smul.addr %s262, 128
          %s267 = scalar_lea.hbm %s2, %s266
          %s268 = sshll.u32 %s261, 4
          %s269 = int_to_ptr.vmem [resolvable:$true] %s268
          %274 = dma.hbm_to_vmem [thread:$0]  %s267, 256, %s269, %s258, 128, 128, 8
        $region36: #{tpu_custom_call.1} parent=23 // pred_fallthru
          _
      $region24: #{tpu_custom_call.1} parent=5 // pred_fallthru
        _
      %p275 = scmp.le.s32.totalorder 1, %s21
      %p276 = scmp.lt.s32.totalorder %s21, 5
      %p277 = pnand %p275, %p276
      %p278 = pneg %p277
      // Predicated region
      $region37: #{tpu_custom_call.1} parent=5 // pred_check
        _
      $region38: #{tpu_custom_call.1} parent=5 // pred_check_branch
        %280 = sbr.rel (%p277) target = $region40
      $region39: #{tpu_custom_call.1} parent=5 // pred_region
        %s281 = ssub.s32 %s21, 1
        %s282 = sand.u32 %s34, 1
        %s283 = scalar_lea.sflag [#allocation3], %s282
        %s284 = sand.u32 %s34, 1
        %s285 = smul.addr %s284, 128
        %s286 = scalar_lea.vmem [#allocation2], %s285
        // Predicated region
        $region41: #{tpu_custom_call.1} parent=39 // pred_check
          %p287 = pneg %p47
        $region42: #{tpu_custom_call.1} parent=39 // pred_check_branch
          %289 = sbr.rel (%p287) target = $region44
        $region43: #{tpu_custom_call.1} parent=39 // pred_region
          %290 = dma.done %s283, 2048
        $region44: #{tpu_custom_call.1} parent=39 // pred_fallthru
          _
        %s291 = sand.u32 %s26, 1
        %s292 = scalar_lea.sflag [#allocation6], %s291
        %s293 = sand.u32 %s60, 1
        %s294 = smul.addr %s293, 128
        %s295 = scalar_lea.vmem [#allocation5], %s294
        // Predicated region
        $region45: #{tpu_custom_call.1} parent=39 // pred_check
          %p296 = pneg %p73
        $region46: #{tpu_custom_call.1} parent=39 // pred_check_branch
          %298 = sbr.rel (%p296) target = $region48
        $region47: #{tpu_custom_call.1} parent=39 // pred_region
          %299 = dma.done %s292, 2048
        $region48: #{tpu_custom_call.1} parent=39 // pred_fallthru
          _
        %s300 = sand.u32 %s26, 1
        %s301 = scalar_lea.sflag [#allocation6], %s300
        %s302 = sand.u32 %s86, 1
        %s303 = smul.addr %s302, 16
        %s304 = scalar_lea.vmem [#allocation7], %s303
        // Predicated region
        $region49: #{tpu_custom_call.1} parent=39 // pred_check
          %p305 = pneg %p99
        $region50: #{tpu_custom_call.1} parent=39 // pred_check_branch
          %307 = sbr.rel (%p305) target = $region52
        $region51: #{tpu_custom_call.1} parent=39 // pred_region
          %308 = dma.done %s301, 256
        $region52: #{tpu_custom_call.1} parent=39 // pred_fallthru
          _
        // Predicated region
        $region53: #{tpu_custom_call.1} parent=39 // pred_check
          %p309 = pneg %p120
        $region54: #{tpu_custom_call.1} parent=39 // pred_check_branch
          %311 = sbr.rel (%p309) target = $region56
        $region55: #{tpu_custom_call.1} parent=39 // pred_region
          %312 = dma.done [#allocation9], 2048
        $region56: #{tpu_custom_call.1} parent=39 // pred_fallthru
          _
        // Predicated region
        $region57: #{tpu_custom_call.1} parent=39 // pred_check
          %p313 = pneg %p141
        $region58: #{tpu_custom_call.1} parent=39 // pred_check_branch
          %315 = sbr.rel (%p313) target = $region60
        $region59: #{tpu_custom_call.1} parent=39 // pred_region
          %316 = dma.done [#allocation9], 2048
        $region60: #{tpu_custom_call.1} parent=39 // pred_fallthru
          _
        %s317 = sand.u32 %s34, 1
        %s318 = scalar_lea.sflag [#allocation3], %s317
        %s319 = sand.u32 %s34, 1
        %s320 = smul.addr %s319, 128
        %s321 = scalar_lea.vmem [#allocation2], %s320
        %p322 = pneg %p47
        %p323 = pneg %p44
        %s324 = sand.u32 %s26, 1
        %s325 = scalar_lea.sflag [#allocation6], %s324
        %s326 = sand.u32 %s60, 1
        %s327 = smul.addr %s326, 128
        %s328 = scalar_lea.vmem [#allocation5], %s327
        %p329 = pneg %p73
        %p330 = pneg %p70
        %s331 = sand.u32 %s26, 1
        %s332 = scalar_lea.sflag [#allocation6], %s331
        %s333 = sand.u32 %s86, 1
        %s334 = smul.addr %s333, 16
        %s335 = scalar_lea.vmem [#allocation7], %s334
        %p336 = pneg %p99
        %p337 = pneg %p96
        %p338 = pneg %p120
        %p339 = pneg %p117
        %p340 = pneg %p141
        %p341 = pneg %p138
        %p342 = pneg %p167
        %p343 = pneg %p164
        %s344 = sand.u32 %s154, 1
        %s345 = scalar_lea.sflag [#allocation4], %s344
        %s346 = sand.u32 %s154, 1
        %s347 = smul.addr %s346, 16
        %s348 = scalar_lea.vmem [#allocation11], %s347
        %s349 = smul.u32 16, %s26
        %s350 = smul.u32 16, %s26
        %s351 = smul.u32 2, %s26
        %s352 = smul.u32 2, %s26
        %v353 = vld [vmem:[%s286] sm:$0xff]
        %v354 = vld [vmem:[%s286 + $0x8] sm:$0xff]
        %v355 = vld [vmem:[%s286 + $0x10] sm:$0xff]
        %v356 = vld [vmem:[%s286 + $0x18] sm:$0xff]
        %v357 = vld [vmem:[%s286 + $0x20] sm:$0xff]
        %v358 = vld [vmem:[%s286 + $0x28] sm:$0xff]
        %v359 = vld [vmem:[%s286 + $0x30] sm:$0xff]
        %v360 = vld [vmem:[%s286 + $0x38] sm:$0xff]
        %v361 = vld [vmem:[%s286 + $0x40] sm:$0xff]
        %v362 = vld [vmem:[%s286 + $0x48] sm:$0xff]
        %v363 = vld [vmem:[%s286 + $0x50] sm:$0xff]
        %v364 = vld [vmem:[%s286 + $0x58] sm:$0xff]
        %v365 = vld [vmem:[%s286 + $0x60] sm:$0xff]
        %v366 = vld [vmem:[%s286 + $0x68] sm:$0xff]
        %v367 = vld [vmem:[%s286 + $0x70] sm:$0xff]
        %v368 = vld [vmem:[%s286 + $0x78] sm:$0xff]
        %v369 = vld [vmem:[%s295] sm:$0xff]
        %v370 = vld [vmem:[%s295 + $0x8] sm:$0xff]
        %v371 = vld [vmem:[%s295 + $0x10] sm:$0xff]
        %v372 = vld [vmem:[%s295 + $0x18] sm:$0xff]
        %v373 = vld [vmem:[%s295 + $0x20] sm:$0xff]
        %v374 = vld [vmem:[%s295 + $0x28] sm:$0xff]
        %v375 = vld [vmem:[%s295 + $0x30] sm:$0xff]
        %v376 = vld [vmem:[%s295 + $0x38] sm:$0xff]
        %v377 = vld [vmem:[%s295 + $0x40] sm:$0xff]
        %v378 = vld [vmem:[%s295 + $0x48] sm:$0xff]
        %v379 = vld [vmem:[%s295 + $0x50] sm:$0xff]
        %v380 = vld [vmem:[%s295 + $0x58] sm:$0xff]
        %v381 = vld [vmem:[%s295 + $0x60] sm:$0xff]
        %v382 = vld [vmem:[%s295 + $0x68] sm:$0xff]
        %v383 = vld [vmem:[%s295 + $0x70] sm:$0xff]
        %v384 = vld [vmem:[%s295 + $0x78] sm:$0xff]
        %385 = vrot.lane.b32.xlu0 %v353, 8
        %v386 = vpop.permute.xlu0 %385
        %387 = vrot.lane.b32.xlu0 %v354, 8
        %v388 = vpop.permute.xlu0 %387
        %389 = vrot.lane.b32.xlu0 %v355, 8
        %v390 = vpop.permute.xlu0 %389
        %391 = vrot.lane.b32.xlu0 %v356, 8
        %v392 = vpop.permute.xlu0 %391
        %393 = vrot.lane.b32.xlu0 %v357, 8
        %v394 = vpop.permute.xlu0 %393
        %395 = vrot.lane.b32.xlu0 %v358, 8
        %v396 = vpop.permute.xlu0 %395
        %397 = vrot.lane.b32.xlu0 %v359, 8
        %v398 = vpop.permute.xlu0 %397
        %399 = vrot.lane.b32.xlu0 %v360, 8
        %v400 = vpop.permute.xlu0 %399
        %401 = vrot.lane.b32.xlu0 %v361, 8
        %v402 = vpop.permute.xlu0 %401
        %403 = vrot.lane.b32.xlu0 %v362, 8
        %v404 = vpop.permute.xlu0 %403
        %405 = vrot.lane.b32.xlu0 %v363, 8
        %v406 = vpop.permute.xlu0 %405
        %407 = vrot.lane.b32.xlu0 %v364, 8
        %v408 = vpop.permute.xlu0 %407
        %409 = vrot.lane.b32.xlu0 %v365, 8
        %v410 = vpop.permute.xlu0 %409
        %411 = vrot.lane.b32.xlu0 %v366, 8
        %v412 = vpop.permute.xlu0 %411
        %413 = vrot.lane.b32.xlu0 %v367, 8
        %v414 = vpop.permute.xlu0 %413
        %415 = vrot.lane.b32.xlu0 %v368, 8
        %v416 = vpop.permute.xlu0 %415
        %417 = vmatprep.subr.mxu0 0.0
        %418 = vmatpush1.msra.mxu0 %v353
        %419 = vmatprep.subr.mxu0 0.0
        %420 = vmatpush1.msra.mxu0 %v354
        %421 = vmatprep.subr.mxu0 0.0
        %422 = vmatpush1.msra.mxu0 %v355
        %423 = vmatprep.subr.mxu0 0.0
        %424 = vmatpush1.msra.mxu0 %v356
        %425 = vmatprep.subr.mxu0 0.0
        %426 = vmatpush1.msra.mxu0 %v357
        %427 = vmatprep.subr.mxu0 0.0
        %428 = vmatpush1.msra.mxu0 %v358
        %429 = vmatprep.subr.mxu0 0.0
        %430 = vmatpush1.msra.mxu0 %v359
        %431 = vmatprep.subr.mxu0 0.0
        %432 = vmatpush1.msra.mxu0 %v360
        %433 = vmatprep.subr.mxu0 0.0
        %434 = vmatpush1.msra.mxu0 %v361
        %435 = vmatprep.subr.mxu0 0.0
        %436 = vmatpush1.msra.mxu0 %v362
        %437 = vmatprep.subr.mxu0 0.0
        %438 = vmatpush1.msra.mxu0 %v363
        %439 = vmatprep.subr.mxu0 0.0
        %440 = vmatpush1.msra.mxu0 %v364
        %441 = vmatprep.subr.mxu0 0.0
        %442 = vmatpush1.msra.mxu0 %v365
        %443 = vmatprep.subr.mxu0 0.0
        %444 = vmatpush1.msra.mxu0 %v366
        %445 = vmatprep.subr.mxu0 0.0
        %446 = vmatpush1.msra.mxu0 %v367
        %447 = vmatprep.subr.mxu0 0.0
        %448 = vmatpush1.msra.mxu0 %v368
        %449 = vmatprep.subr.mxu0 0.0
        %450 = vmatpush1.msra.mxu0 0.0
        %451 = vmatprep.subr.mxu0 0.0
        %452 = vmatpush1.msra.mxu0 0.0
        %453 = vmatprep.subr.mxu0 0.0
        %454 = vmatpush1.msra.mxu0 0.0
        %455 = vmatprep.subr.mxu0 0.0
        %456 = vmatpush1.msra.mxu0 0.0
        %457 = vmatprep.subr.mxu0 0.0
        %458 = vmatpush1.msra.mxu0 0.0
        %459 = vmatprep.subr.mxu0 0.0
        %460 = vmatpush1.msra.mxu0 0.0
        %461 = vmatprep.subr.mxu0 0.0
        %462 = vmatpush1.msra.mxu0 0.0
        %463 = vmatprep.subr.mxu0 0.0
        %464 = vmatpush1.msra.mxu0 0.0
        %465 = vmatprep.subr.mxu0 0.0
        %466 = vmatpush1.msra.mxu0 0.0
        %467 = vmatprep.subr.mxu0 0.0
        %468 = vmatpush1.msra.mxu0 0.0
        %469 = vmatprep.subr.mxu0 0.0
        %470 = vmatpush1.msra.mxu0 0.0
        %471 = vmatprep.subr.mxu0 0.0
        %472 = vmatpush1.msra.mxu0 0.0
        %473 = vmatprep.subr.mxu0 0.0
        %474 = vmatpush1.msra.mxu0 0.0
        %475 = vmatprep.subr.mxu0 0.0
        %476 = vmatpush1.msra.mxu0 0.0
        %477 = vmatprep.subr.mxu0 0.0
        %478 = vmatpush1.msra.mxu0 0.0
        %479 = vmatprep.subr.mxu0 0.0
        %480 = vmatpush1.msra.mxu0 0.0
        %481 = vmatprep.mubr.f32.mxu0 0.0
        %482 = vmatmul.mubr.f32.gmra.mrb[0].mxu0 %v369
        %v483 = vpop.f32.mrb[0].mxu0
        %v484 = vadd.f32 %v386, %v483
        %v485 = vpop.f32.mrb[0].mxu0
        %486 = vmatprep.mubr.f32.mxu0 0.0
        %487 = vmatmul.mubr.f32.gmra.mrb[0].mxu0 %v370
        %v488 = vpop.f32.mrb[0].mxu0
        %v489 = vadd.f32 %v388, %v488
        %v490 = vpop.f32.mrb[0].mxu0
        %491 = vmatprep.mubr.f32.mxu0 0.0
        %492 = vmatmul.mubr.f32.gmra.mrb[0].mxu0 %v371
        %v493 = vpop.f32.mrb[0].mxu0
        %v494 = vadd.f32 %v390, %v493
        %v495 = vpop.f32.mrb[0].mxu0
        %496 = vmatprep.mubr.f32.mxu0 0.0
        %497 = vmatmul.mubr.f32.gmra.mrb[0].mxu0 %v372
        %v498 = vpop.f32.mrb[0].mxu0
        %v499 = vadd.f32 %v392, %v498
        %v500 = vpop.f32.mrb[0].mxu0
        %501 = vmatprep.mubr.f32.mxu0 0.0
        %502 = vmatmul.mubr.f32.gmra.mrb[0].mxu0 %v373
        %v503 = vpop.f32.mrb[0].mxu0
        %v504 = vadd.f32 %v394, %v503
        %v505 = vpop.f32.mrb[0].mxu0
        %506 = vmatprep.mubr.f32.mxu0 0.0
        %507 = vmatmul.mubr.f32.gmra.mrb[0].mxu0 %v374
        %v508 = vpop.f32.mrb[0].mxu0
        %v509 = vadd.f32 %v396, %v508
        %v510 = vpop.f32.mrb[0].mxu0
        %511 = vmatprep.mubr.f32.mxu0 0.0
        %512 = vmatmul.mubr.f32.gmra.mrb[0].mxu0 %v375
        %v513 = vpop.f32.mrb[0].mxu0
        %v514 = vadd.f32 %v398, %v513
        %v515 = vpop.f32.mrb[0].mxu0
        %516 = vmatprep.mubr.f32.mxu0 0.0
        %517 = vmatmul.mubr.f32.gmra.mrb[0].mxu0 %v376
        %v518 = vpop.f32.mrb[0].mxu0
        %v519 = vadd.f32 %v400, %v518
        %v520 = vpop.f32.mrb[0].mxu0
        %521 = vmatprep.mubr.f32.mxu0 0.0
        %522 = vmatmul.mubr.f32.gmra.mrb[0].mxu0 %v377
        %v523 = vpop.f32.mrb[0].mxu0
        %v524 = vadd.f32 %v402, %v523
        %v525 = vpop.f32.mrb[0].mxu0
        %526 = vmatprep.mubr.f32.mxu0 0.0
        %527 = vmatmul.mubr.f32.gmra.mrb[0].mxu0 %v378
        %v528 = vpop.f32.mrb[0].mxu0
        %v529 = vadd.f32 %v404, %v528
        %v530 = vpop.f32.mrb[0].mxu0
        %531 = vmatprep.mubr.f32.mxu0 0.0
        %532 = vmatmul.mubr.f32.gmra.mrb[0].mxu0 %v379
        %v533 = vpop.f32.mrb[0].mxu0
        %v534 = vadd.f32 %v406, %v533
        %v535 = vpop.f32.mrb[0].mxu0
        %536 = vmatprep.mubr.f32.mxu0 0.0
        %537 = vmatmul.mubr.f32.gmra.mrb[0].mxu0 %v380
        %v538 = vpop.f32.mrb[0].mxu0
        %v539 = vadd.f32 %v408, %v538
        %v540 = vpop.f32.mrb[0].mxu0
        %541 = vmatprep.mubr.f32.mxu0 0.0
        %542 = vmatmul.mubr.f32.gmra.mrb[0].mxu0 %v381
        %v543 = vpop.f32.mrb[0].mxu0
        %v544 = vadd.f32 %v410, %v543
        %v545 = vpop.f32.mrb[0].mxu0
        %546 = vmatprep.mubr.f32.mxu0 0.0
        %547 = vmatmul.mubr.f32.gmra.mrb[0].mxu0 %v382
        %v548 = vpop.f32.mrb[0].mxu0
        %v549 = vadd.f32 %v412, %v548
        %v550 = vpop.f32.mrb[0].mxu0
        %551 = vmatprep.mubr.f32.mxu0 0.0
        %552 = vmatmul.mubr.f32.gmra.mrb[0].mxu0 %v383
        %v553 = vpop.f32.mrb[0].mxu0
        %v554 = vadd.f32 %v414, %v553
        %v555 = vpop.f32.mrb[0].mxu0
        %556 = vmatprep.mubr.f32.mxu0 0.0
        %557 = vmatmul.mubr.f32.gmra.mrb[0].mxu0 %v384
        %v558 = vpop.f32.mrb[0].mxu0
        %v559 = vadd.f32 %v416, %v558
        %v560 = vpop.f32.mrb[0].mxu0
        %561 = vdwg.mxu0
        %v562 = vld [vmem:[#allocation8] sm:$0xff]
        %v563 = vld [vmem:[#allocation8 + $0x8] sm:$0xff]
        %v564 = vld [vmem:[#allocation8 + $0x10] sm:$0xff]
        %v565 = vld [vmem:[#allocation8 + $0x18] sm:$0xff]
        %v566 = vld [vmem:[#allocation8 + $0x20] sm:$0xff]
        %v567 = vld [vmem:[#allocation8 + $0x28] sm:$0xff]
        %v568 = vld [vmem:[#allocation8 + $0x30] sm:$0xff]
        %v569 = vld [vmem:[#allocation8 + $0x38] sm:$0xff]
        %v570 = vld [vmem:[#allocation8 + $0x40] sm:$0xff]
        %v571 = vld [vmem:[#allocation8 + $0x48] sm:$0xff]
        %v572 = vld [vmem:[#allocation8 + $0x50] sm:$0xff]
        %v573 = vld [vmem:[#allocation8 + $0x58] sm:$0xff]
        %v574 = vld [vmem:[#allocation8 + $0x60] sm:$0xff]
        %v575 = vld [vmem:[#allocation8 + $0x68] sm:$0xff]
        %v576 = vld [vmem:[#allocation8 + $0x70] sm:$0xff]
        %v577 = vld [vmem:[#allocation8 + $0x78] sm:$0xff]
        %578 = vmatprep.subr.mxu0 0.0
        %579 = vmatpush1.msra.mxu0 %v562
        %580 = vmatprep.subr.mxu0 0.0
        %581 = vmatpush1.msra.mxu0 %v563
        %582 = vmatprep.subr.mxu0 0.0
        %583 = vmatpush1.msra.mxu0 %v564
        %584 = vmatprep.subr.mxu0 0.0
        %585 = vmatpush1.msra.mxu0 %v565
        %586 = vmatprep.subr.mxu0 0.0
        %587 = vmatpush1.msra.mxu0 %v566
        %588 = vmatprep.subr.mxu0 0.0
        %589 = vmatpush1.msra.mxu0 %v567
        %590 = vmatprep.subr.mxu0 0.0
        %591 = vmatpush1.msra.mxu0 %v568
        %592 = vmatprep.subr.mxu0 0.0
        %593 = vmatpush1.msra.mxu0 %v569
        %594 = vmatprep.subr.mxu0 0.0
        %595 = vmatpush1.msra.mxu0 %v570
        %596 = vmatprep.subr.mxu0 0.0
        %597 = vmatpush1.msra.mxu0 %v571
        %598 = vmatprep.subr.mxu0 0.0
        %599 = vmatpush1.msra.mxu0 %v572
        %600 = vmatprep.subr.mxu0 0.0
        %601 = vmatpush1.msra.mxu0 %v573
        %602 = vmatprep.subr.mxu0 0.0
        %603 = vmatpush1.msra.mxu0 %v574
        %604 = vmatprep.subr.mxu0 0.0
        %605 = vmatpush1.msra.mxu0 %v575
        %606 = vmatprep.subr.mxu0 0.0
        %607 = vmatpush1.msra.mxu0 %v576
        %608 = vmatprep.subr.mxu0 0.0
        %609 = vmatpush1.msra.mxu0 %v577
        %610 = vmatprep.subr.mxu0 0.0
        %611 = vmatpush1.msra.mxu0 0.0
        %612 = vmatprep.subr.mxu0 0.0
        %613 = vmatpush1.msra.mxu0 0.0
        %614 = vmatprep.subr.mxu0 0.0
        %615 = vmatpush1.msra.mxu0 0.0
        %616 = vmatprep.subr.mxu0 0.0
        %617 = vmatpush1.msra.mxu0 0.0
        %618 = vmatprep.subr.mxu0 0.0
        %619 = vmatpush1.msra.mxu0 0.0
        %620 = vmatprep.subr.mxu0 0.0
        %621 = vmatpush1.msra.mxu0 0.0
        %622 = vmatprep.subr.mxu0 0.0
        %623 = vmatpush1.msra.mxu0 0.0
        %624 = vmatprep.subr.mxu0 0.0
        %625 = vmatpush1.msra.mxu0 0.0
        %626 = vmatprep.subr.mxu0 0.0
        %627 = vmatpush1.msra.mxu0 0.0
        %628 = vmatprep.subr.mxu0 0.0
        %629 = vmatpush1.msra.mxu0 0.0
        %630 = vmatprep.subr.mxu0 0.0
        %631 = vmatpush1.msra.mxu0 0.0
        %632 = vmatprep.subr.mxu0 0.0
        %633 = vmatpush1.msra.mxu0 0.0
        %634 = vmatprep.subr.mxu0 0.0
        %635 = vmatpush1.msra.mxu0 0.0
        %636 = vmatprep.subr.mxu0 0.0
        %637 = vmatpush1.msra.mxu0 0.0
        %638 = vmatprep.subr.mxu0 0.0
        %639 = vmatpush1.msra.mxu0 0.0
        %640 = vmatprep.subr.mxu0 0.0
        %641 = vmatpush1.msra.mxu0 0.0
        %642 = vmatprep.mubr.f32.mxu0 0.0
        %643 = vmatmul.mubr.f32.gmra.mrb[0].mxu0 %v484
        %v644 = vpop.f32.mrb[0].mxu0
        %v645 = vadd.f32 0.0, %v644
        %v646 = vpop.f32.mrb[0].mxu0
        %647 = vmatprep.mubr.f32.mxu0 0.0
        %648 = vmatmul.mubr.f32.gmra.mrb[0].mxu0 %v489
        %v649 = vpop.f32.mrb[0].mxu0
        %v650 = vadd.f32 0.0, %v649
        %v651 = vpop.f32.mrb[0].mxu0
        %652 = vmatprep.mubr.f32.mxu0 0.0
        %653 = vmatmul.mubr.f32.gmra.mrb[0].mxu0 %v494
        %v654 = vpop.f32.mrb[0].mxu0
        %v655 = vadd.f32 0.0, %v654
        %v656 = vpop.f32.mrb[0].mxu0
        %657 = vmatprep.mubr.f32.mxu0 0.0
        %658 = vmatmul.mubr.f32.gmra.mrb[0].mxu0 %v499
        %v659 = vpop.f32.mrb[0].mxu0
        %v660 = vadd.f32 0.0, %v659
        %v661 = vpop.f32.mrb[0].mxu0
        %662 = vmatprep.mubr.f32.mxu0 0.0
        %663 = vmatmul.mubr.f32.gmra.mrb[0].mxu0 %v504
        %v664 = vpop.f32.mrb[0].mxu0
        %v665 = vadd.f32 0.0, %v664
        %v666 = vpop.f32.mrb[0].mxu0
        %667 = vmatprep.mubr.f32.mxu0 0.0
        %668 = vmatmul.mubr.f32.gmra.mrb[0].mxu0 %v509
        %v669 = vpop.f32.mrb[0].mxu0
        %v670 = vadd.f32 0.0, %v669
        %v671 = vpop.f32.mrb[0].mxu0
        %672 = vmatprep.mubr.f32.mxu0 0.0
        %673 = vmatmul.mubr.f32.gmra.mrb[0].mxu0 %v514
        %v674 = vpop.f32.mrb[0].mxu0
        %v675 = vadd.f32 0.0, %v674
        %v676 = vpop.f32.mrb[0].mxu0
        %677 = vmatprep.mubr.f32.mxu0 0.0
        %678 = vmatmul.mubr.f32.gmra.mrb[0].mxu0 %v519
        %v679 = vpop.f32.mrb[0].mxu0
        %v680 = vadd.f32 0.0, %v679
        %v681 = vpop.f32.mrb[0].mxu0
        %682 = vmatprep.mubr.f32.mxu0 0.0
        %683 = vmatmul.mubr.f32.gmra.mrb[0].mxu0 %v524
        %v684 = vpop.f32.mrb[0].mxu0
        %v685 = vadd.f32 0.0, %v684
        %v686 = vpop.f32.mrb[0].mxu0
        %687 = vmatprep.mubr.f32.mxu0 0.0
        %688 = vmatmul.mubr.f32.gmra.mrb[0].mxu0 %v529
        %v689 = vpop.f32.mrb[0].mxu0
        %v690 = vadd.f32 0.0, %v689
        %v691 = vpop.f32.mrb[0].mxu0
        %692 = vmatprep.mubr.f32.mxu0 0.0
        %693 = vmatmul.mubr.f32.gmra.mrb[0].mxu0 %v534
        %v694 = vpop.f32.mrb[0].mxu0
        %v695 = vadd.f32 0.0, %v694
        %v696 = vpop.f32.mrb[0].mxu0
        %697 = vmatprep.mubr.f32.mxu0 0.0
        %698 = vmatmul.mubr.f32.gmra.mrb[0].mxu0 %v539
        %v699 = vpop.f32.mrb[0].mxu0
        %v700 = vadd.f32 0.0, %v699
        %v701 = vpop.f32.mrb[0].mxu0
        %702 = vmatprep.mubr.f32.mxu0 0.0
        %703 = vmatmul.mubr.f32.gmra.mrb[0].mxu0 %v544
        %v704 = vpop.f32.mrb[0].mxu0
        %v705 = vadd.f32 0.0, %v704
        %v706 = vpop.f32.mrb[0].mxu0
        %707 = vmatprep.mubr.f32.mxu0 0.0
        %708 = vmatmul.mubr.f32.gmra.mrb[0].mxu0 %v549
        %v709 = vpop.f32.mrb[0].mxu0
        %v710 = vadd.f32 0.0, %v709
        %v711 = vpop.f32.mrb[0].mxu0
        %712 = vmatprep.mubr.f32.mxu0 0.0
        %713 = vmatmul.mubr.f32.gmra.mrb[0].mxu0 %v554
        %v714 = vpop.f32.mrb[0].mxu0
        %v715 = vadd.f32 0.0, %v714
        %v716 = vpop.f32.mrb[0].mxu0
        %717 = vmatprep.mubr.f32.mxu0 0.0
        %718 = vmatmul.mubr.f32.gmra.mrb[0].mxu0 %v559
        %v719 = vpop.f32.mrb[0].mxu0
        %v720 = vadd.f32 0.0, %v719
        %v721 = vpop.f32.mrb[0].mxu0
        %722 = vdwg.mxu0
        %v723 = vmax.f32 %v645, 0.0
        %v724 = vmax.f32 %v650, 0.0
        %v725 = vmax.f32 %v655, 0.0
        %v726 = vmax.f32 %v660, 0.0
        %v727 = vmax.f32 %v665, 0.0
        %v728 = vmax.f32 %v670, 0.0
        %v729 = vmax.f32 %v675, 0.0
        %v730 = vmax.f32 %v680, 0.0
        %v731 = vmax.f32 %v685, 0.0
        %v732 = vmax.f32 %v690, 0.0
        %v733 = vmax.f32 %v695, 0.0
        %v734 = vmax.f32 %v700, 0.0
        %v735 = vmax.f32 %v705, 0.0
        %v736 = vmax.f32 %v710, 0.0
        %v737 = vmax.f32 %v715, 0.0
        %v738 = vmax.f32 %v720, 0.0
        %739 = vrot.lane.b32.xlu0 %v723, 32
        %v740 = vpop.permute.xlu0 %739
        %741 = vrot.lane.b32.xlu0 %v724, 32
        %v742 = vpop.permute.xlu0 %741
        %743 = vrot.lane.b32.xlu0 %v725, 32
        %v744 = vpop.permute.xlu0 %743
        %745 = vrot.lane.b32.xlu0 %v726, 32
        %v746 = vpop.permute.xlu0 %745
        %747 = vrot.lane.b32.xlu0 %v727, 32
        %v748 = vpop.permute.xlu0 %747
        %749 = vrot.lane.b32.xlu0 %v728, 32
        %v750 = vpop.permute.xlu0 %749
        %751 = vrot.lane.b32.xlu0 %v729, 32
        %v752 = vpop.permute.xlu0 %751
        %753 = vrot.lane.b32.xlu0 %v730, 32
        %v754 = vpop.permute.xlu0 %753
        %755 = vrot.lane.b32.xlu0 %v731, 32
        %v756 = vpop.permute.xlu0 %755
        %757 = vrot.lane.b32.xlu0 %v732, 32
        %v758 = vpop.permute.xlu0 %757
        %759 = vrot.lane.b32.xlu0 %v733, 32
        %v760 = vpop.permute.xlu0 %759
        %761 = vrot.lane.b32.xlu0 %v734, 32
        %v762 = vpop.permute.xlu0 %761
        %763 = vrot.lane.b32.xlu0 %v735, 32
        %v764 = vpop.permute.xlu0 %763
        %765 = vrot.lane.b32.xlu0 %v736, 32
        %v766 = vpop.permute.xlu0 %765
        %767 = vrot.lane.b32.xlu0 %v737, 32
        %v768 = vpop.permute.xlu0 %767
        %769 = vrot.lane.b32.xlu0 %v738, 32
        %v770 = vpop.permute.xlu0 %769
        %771 = vmatprep.subr.mxu0 0.0
        %772 = vmatpush1.msra.mxu0 %v723
        %773 = vmatprep.subr.mxu0 0.0
        %774 = vmatpush1.msra.mxu0 %v724
        %775 = vmatprep.subr.mxu0 0.0
        %776 = vmatpush1.msra.mxu0 %v725
        %777 = vmatprep.subr.mxu0 0.0
        %778 = vmatpush1.msra.mxu0 %v726
        %779 = vmatprep.subr.mxu0 0.0
        %780 = vmatpush1.msra.mxu0 %v727
        %781 = vmatprep.subr.mxu0 0.0
        %782 = vmatpush1.msra.mxu0 %v728
        %783 = vmatprep.subr.mxu0 0.0
        %784 = vmatpush1.msra.mxu0 %v729
        %785 = vmatprep.subr.mxu0 0.0
        %786 = vmatpush1.msra.mxu0 %v730
        %787 = vmatprep.subr.mxu0 0.0
        %788 = vmatpush1.msra.mxu0 %v731
        %789 = vmatprep.subr.mxu0 0.0
        %790 = vmatpush1.msra.mxu0 %v732
        %791 = vmatprep.subr.mxu0 0.0
        %792 = vmatpush1.msra.mxu0 %v733
        %793 = vmatprep.subr.mxu0 0.0
        %794 = vmatpush1.msra.mxu0 %v734
        %795 = vmatprep.subr.mxu0 0.0
        %796 = vmatpush1.msra.mxu0 %v735
        %797 = vmatprep.subr.mxu0 0.0
        %798 = vmatpush1.msra.mxu0 %v736
        %799 = vmatprep.subr.mxu0 0.0
        %800 = vmatpush1.msra.mxu0 %v737
        %801 = vmatprep.subr.mxu0 0.0
        %802 = vmatpush1.msra.mxu0 %v738
        %803 = vmatprep.subr.mxu0 0.0
        %804 = vmatpush1.msra.mxu0 0.0
        %805 = vmatprep.subr.mxu0 0.0
        %806 = vmatpush1.msra.mxu0 0.0
        %807 = vmatprep.subr.mxu0 0.0
        %808 = vmatpush1.msra.mxu0 0.0
        %809 = vmatprep.subr.mxu0 0.0
        %810 = vmatpush1.msra.mxu0 0.0
        %811 = vmatprep.subr.mxu0 0.0
        %812 = vmatpush1.msra.mxu0 0.0
        %813 = vmatprep.subr.mxu0 0.0
        %814 = vmatpush1.msra.mxu0 0.0
        %815 = vmatprep.subr.mxu0 0.0
        %816 = vmatpush1.msra.mxu0 0.0
        %817 = vmatprep.subr.mxu0 0.0
        %818 = vmatpush1.msra.mxu0 0.0
        %819 = vmatprep.subr.mxu0 0.0
        %820 = vmatpush1.msra.mxu0 0.0
        %821 = vmatprep.subr.mxu0 0.0
        %822 = vmatpush1.msra.mxu0 0.0
        %823 = vmatprep.subr.mxu0 0.0
        %824 = vmatpush1.msra.mxu0 0.0
        %825 = vmatprep.subr.mxu0 0.0
        %826 = vmatpush1.msra.mxu0 0.0
        %827 = vmatprep.subr.mxu0 0.0
        %828 = vmatpush1.msra.mxu0 0.0
        %829 = vmatprep.subr.mxu0 0.0
        %830 = vmatpush1.msra.mxu0 0.0
        %831 = vmatprep.subr.mxu0 0.0
        %832 = vmatpush1.msra.mxu0 0.0
        %833 = vmatprep.subr.mxu0 0.0
        %834 = vmatpush1.msra.mxu0 0.0
        %835 = vmatprep.mubr.f32.mxu0 0.0
        %836 = vmatmul.mubr.f32.gmra.mrb[0].mxu0 %v369
        %v837 = vpop.f32.mrb[0].mxu0
        %v838 = vadd.f32 %v740, %v837
        %v839 = vpop.f32.mrb[0].mxu0
        %840 = vmatprep.mubr.f32.mxu0 0.0
        %841 = vmatmul.mubr.f32.gmra.mrb[0].mxu0 %v370
        %v842 = vpop.f32.mrb[0].mxu0
        %v843 = vadd.f32 %v742, %v842
        %v844 = vpop.f32.mrb[0].mxu0
        %845 = vmatprep.mubr.f32.mxu0 0.0
        %846 = vmatmul.mubr.f32.gmra.mrb[0].mxu0 %v371
        %v847 = vpop.f32.mrb[0].mxu0
        %v848 = vadd.f32 %v744, %v847
        %v849 = vpop.f32.mrb[0].mxu0
        %850 = vmatprep.mubr.f32.mxu0 0.0
        %851 = vmatmul.mubr.f32.gmra.mrb[0].mxu0 %v372
        %v852 = vpop.f32.mrb[0].mxu0
        %v853 = vadd.f32 %v746, %v852
        %v854 = vpop.f32.mrb[0].mxu0
        %855 = vmatprep.mubr.f32.mxu0 0.0
        %856 = vmatmul.mubr.f32.gmra.mrb[0].mxu0 %v373
        %v857 = vpop.f32.mrb[0].mxu0
        %v858 = vadd.f32 %v748, %v857
        %v859 = vpop.f32.mrb[0].mxu0
        %860 = vmatprep.mubr.f32.mxu0 0.0
        %861 = vmatmul.mubr.f32.gmra.mrb[0].mxu0 %v374
        %v862 = vpop.f32.mrb[0].mxu0
        %v863 = vadd.f32 %v750, %v862
        %v864 = vpop.f32.mrb[0].mxu0
        %865 = vmatprep.mubr.f32.mxu0 0.0
        %866 = vmatmul.mubr.f32.gmra.mrb[0].mxu0 %v375
        %v867 = vpop.f32.mrb[0].mxu0
        %v868 = vadd.f32 %v752, %v867
        %v869 = vpop.f32.mrb[0].mxu0
        %870 = vmatprep.mubr.f32.mxu0 0.0
        %871 = vmatmul.mubr.f32.gmra.mrb[0].mxu0 %v376
        %v872 = vpop.f32.mrb[0].mxu0
        %v873 = vadd.f32 %v754, %v872
        %v874 = vpop.f32.mrb[0].mxu0
        %875 = vmatprep.mubr.f32.mxu0 0.0
        %876 = vmatmul.mubr.f32.gmra.mrb[0].mxu0 %v377
        %v877 = vpop.f32.mrb[0].mxu0
        %v878 = vadd.f32 %v756, %v877
        %v879 = vpop.f32.mrb[0].mxu0
        %880 = vmatprep.mubr.f32.mxu0 0.0
        %881 = vmatmul.mubr.f32.gmra.mrb[0].mxu0 %v378
        %v882 = vpop.f32.mrb[0].mxu0
        %v883 = vadd.f32 %v758, %v882
        %v884 = vpop.f32.mrb[0].mxu0
        %885 = vmatprep.mubr.f32.mxu0 0.0
        %886 = vmatmul.mubr.f32.gmra.mrb[0].mxu0 %v379
        %v887 = vpop.f32.mrb[0].mxu0
        %v888 = vadd.f32 %v760, %v887
        %v889 = vpop.f32.mrb[0].mxu0
        %890 = vmatprep.mubr.f32.mxu0 0.0
        %891 = vmatmul.mubr.f32.gmra.mrb[0].mxu0 %v380
        %v892 = vpop.f32.mrb[0].mxu0
        %v893 = vadd.f32 %v762, %v892
        %v894 = vpop.f32.mrb[0].mxu0
        %895 = vmatprep.mubr.f32.mxu0 0.0
        %896 = vmatmul.mubr.f32.gmra.mrb[0].mxu0 %v381
        %v897 = vpop.f32.mrb[0].mxu0
        %v898 = vadd.f32 %v764, %v897
        %v899 = vpop.f32.mrb[0].mxu0
        %900 = vmatprep.mubr.f32.mxu0 0.0
        %901 = vmatmul.mubr.f32.gmra.mrb[0].mxu0 %v382
        %v902 = vpop.f32.mrb[0].mxu0
        %v903 = vadd.f32 %v766, %v902
        %v904 = vpop.f32.mrb[0].mxu0
        %905 = vmatprep.mubr.f32.mxu0 0.0
        %906 = vmatmul.mubr.f32.gmra.mrb[0].mxu0 %v383
        %v907 = vpop.f32.mrb[0].mxu0
        %v908 = vadd.f32 %v768, %v907
        %v909 = vpop.f32.mrb[0].mxu0
        %910 = vmatprep.mubr.f32.mxu0 0.0
        %911 = vmatmul.mubr.f32.gmra.mrb[0].mxu0 %v384
        %v912 = vpop.f32.mrb[0].mxu0
        %v913 = vadd.f32 %v770, %v912
        %v914 = vpop.f32.mrb[0].mxu0
        %915 = vdwg.mxu0
        %v916 = vld [vmem:[#allocation10] sm:$0xff]
        %v917 = vld [vmem:[#allocation10 + $0x8] sm:$0xff]
        %v918 = vld [vmem:[#allocation10 + $0x10] sm:$0xff]
        %v919 = vld [vmem:[#allocation10 + $0x18] sm:$0xff]
        %v920 = vld [vmem:[#allocation10 + $0x20] sm:$0xff]
        %v921 = vld [vmem:[#allocation10 + $0x28] sm:$0xff]
        %v922 = vld [vmem:[#allocation10 + $0x30] sm:$0xff]
        %v923 = vld [vmem:[#allocation10 + $0x38] sm:$0xff]
        %v924 = vld [vmem:[#allocation10 + $0x40] sm:$0xff]
        %v925 = vld [vmem:[#allocation10 + $0x48] sm:$0xff]
        %v926 = vld [vmem:[#allocation10 + $0x50] sm:$0xff]
        %v927 = vld [vmem:[#allocation10 + $0x58] sm:$0xff]
        %v928 = vld [vmem:[#allocation10 + $0x60] sm:$0xff]
        %v929 = vld [vmem:[#allocation10 + $0x68] sm:$0xff]
        %v930 = vld [vmem:[#allocation10 + $0x70] sm:$0xff]
        %v931 = vld [vmem:[#allocation10 + $0x78] sm:$0xff]
        %932 = vmatprep.subr.mxu0 0.0
        %933 = vmatpush1.msra.mxu0 %v916
        %934 = vmatprep.subr.mxu0 0.0
        %935 = vmatpush1.msra.mxu0 %v917
        %936 = vmatprep.subr.mxu0 0.0
        %937 = vmatpush1.msra.mxu0 %v918
        %938 = vmatprep.subr.mxu0 0.0
        %939 = vmatpush1.msra.mxu0 %v919
        %940 = vmatprep.subr.mxu0 0.0
        %941 = vmatpush1.msra.mxu0 %v920
        %942 = vmatprep.subr.mxu0 0.0
        %943 = vmatpush1.msra.mxu0 %v921
        %944 = vmatprep.subr.mxu0 0.0
        %945 = vmatpush1.msra.mxu0 %v922
        %946 = vmatprep.subr.mxu0 0.0
        %947 = vmatpush1.msra.mxu0 %v923
        %948 = vmatprep.subr.mxu0 0.0
        %949 = vmatpush1.msra.mxu0 %v924
        %950 = vmatprep.subr.mxu0 0.0
        %951 = vmatpush1.msra.mxu0 %v925
        %952 = vmatprep.subr.mxu0 0.0
        %953 = vmatpush1.msra.mxu0 %v926
        %954 = vmatprep.subr.mxu0 0.0
        %955 = vmatpush1.msra.mxu0 %v927
        %956 = vmatprep.subr.mxu0 0.0
        %957 = vmatpush1.msra.mxu0 %v928
        %958 = vmatprep.subr.mxu0 0.0
        %959 = vmatpush1.msra.mxu0 %v929
        %960 = vmatprep.subr.mxu0 0.0
        %961 = vmatpush1.msra.mxu0 %v930
        %962 = vmatprep.subr.mxu0 0.0
        %963 = vmatpush1.msra.mxu0 %v931
        %964 = vmatprep.subr.mxu0 0.0
        %965 = vmatpush1.msra.mxu0 0.0
        %966 = vmatprep.subr.mxu0 0.0
        %967 = vmatpush1.msra.mxu0 0.0
        %968 = vmatprep.subr.mxu0 0.0
        %969 = vmatpush1.msra.mxu0 0.0
        %970 = vmatprep.subr.mxu0 0.0
        %971 = vmatpush1.msra.mxu0 0.0
        %972 = vmatprep.subr.mxu0 0.0
        %973 = vmatpush1.msra.mxu0 0.0
        %974 = vmatprep.subr.mxu0 0.0
        %975 = vmatpush1.msra.mxu0 0.0
        %976 = vmatprep.subr.mxu0 0.0
        %977 = vmatpush1.msra.mxu0 0.0
        %978 = vmatprep.subr.mxu0 0.0
        %979 = vmatpush1.msra.mxu0 0.0
        %980 = vmatprep.subr.mxu0 0.0
        %981 = vmatpush1.msra.mxu0 0.0
        %982 = vmatprep.subr.mxu0 0.0
        %983 = vmatpush1.msra.mxu0 0.0
        %984 = vmatprep.subr.mxu0 0.0
        %985 = vmatpush1.msra.mxu0 0.0
        %986 = vmatprep.subr.mxu0 0.0
        %987 = vmatpush1.msra.mxu0 0.0
        %988 = vmatprep.subr.mxu0 0.0
        %989 = vmatpush1.msra.mxu0 0.0
        %990 = vmatprep.subr.mxu0 0.0
        %991 = vmatpush1.msra.mxu0 0.0
        %992 = vmatprep.subr.mxu0 0.0
        %993 = vmatpush1.msra.mxu0 0.0
        %994 = vmatprep.subr.mxu0 0.0
        %995 = vmatpush1.msra.mxu0 0.0
        %996 = vmatprep.mubr.f32.mxu0 0.0
        %997 = vmatmul.mubr.f32.gmra.mrb[0].mxu0 %v838
        %v998 = vpop.f32.mrb[0].mxu0
        %v999 = vadd.f32 0.0, %v998
        %v1000 = vpop.f32.mrb[0].mxu0
        %1001 = vmatprep.mubr.f32.mxu0 0.0
        %1002 = vmatmul.mubr.f32.gmra.mrb[0].mxu0 %v843
        %v1003 = vpop.f32.mrb[0].mxu0
        %v1004 = vadd.f32 0.0, %v1003
        %v1005 = vpop.f32.mrb[0].mxu0
        %1006 = vmatprep.mubr.f32.mxu0 0.0
        %1007 = vmatmul.mubr.f32.gmra.mrb[0].mxu0 %v848
        %v1008 = vpop.f32.mrb[0].mxu0
        %v1009 = vadd.f32 0.0, %v1008
        %v1010 = vpop.f32.mrb[0].mxu0
        %1011 = vmatprep.mubr.f32.mxu0 0.0
        %1012 = vmatmul.mubr.f32.gmra.mrb[0].mxu0 %v853
        %v1013 = vpop.f32.mrb[0].mxu0
        %v1014 = vadd.f32 0.0, %v1013
        %v1015 = vpop.f32.mrb[0].mxu0
        %1016 = vmatprep.mubr.f32.mxu0 0.0
        %1017 = vmatmul.mubr.f32.gmra.mrb[0].mxu0 %v858
        %v1018 = vpop.f32.mrb[0].mxu0
        %v1019 = vadd.f32 0.0, %v1018
        %v1020 = vpop.f32.mrb[0].mxu0
        %1021 = vmatprep.mubr.f32.mxu0 0.0
        %1022 = vmatmul.mubr.f32.gmra.mrb[0].mxu0 %v863
        %v1023 = vpop.f32.mrb[0].mxu0
        %v1024 = vadd.f32 0.0, %v1023
        %v1025 = vpop.f32.mrb[0].mxu0
        %1026 = vmatprep.mubr.f32.mxu0 0.0
        %1027 = vmatmul.mubr.f32.gmra.mrb[0].mxu0 %v868
        %v1028 = vpop.f32.mrb[0].mxu0
        %v1029 = vadd.f32 0.0, %v1028
        %v1030 = vpop.f32.mrb[0].mxu0
        %1031 = vmatprep.mubr.f32.mxu0 0.0
        %1032 = vmatmul.mubr.f32.gmra.mrb[0].mxu0 %v873
        %v1033 = vpop.f32.mrb[0].mxu0
        %v1034 = vadd.f32 0.0, %v1033
        %v1035 = vpop.f32.mrb[0].mxu0
        %1036 = vmatprep.mubr.f32.mxu0 0.0
        %1037 = vmatmul.mubr.f32.gmra.mrb[0].mxu0 %v878
        %v1038 = vpop.f32.mrb[0].mxu0
        %v1039 = vadd.f32 0.0, %v1038
        %v1040 = vpop.f32.mrb[0].mxu0
        %1041 = vmatprep.mubr.f32.mxu0 0.0
        %1042 = vmatmul.mubr.f32.gmra.mrb[0].mxu0 %v883
        %v1043 = vpop.f32.mrb[0].mxu0
        %v1044 = vadd.f32 0.0, %v1043
        %v1045 = vpop.f32.mrb[0].mxu0
        %1046 = vmatprep.mubr.f32.mxu0 0.0
        %1047 = vmatmul.mubr.f32.gmra.mrb[0].mxu0 %v888
        %v1048 = vpop.f32.mrb[0].mxu0
        %v1049 = vadd.f32 0.0, %v1048
        %v1050 = vpop.f32.mrb[0].mxu0
        %1051 = vmatprep.mubr.f32.mxu0 0.0
        %1052 = vmatmul.mubr.f32.gmra.mrb[0].mxu0 %v893
        %v1053 = vpop.f32.mrb[0].mxu0
        %v1054 = vadd.f32 0.0, %v1053
        %v1055 = vpop.f32.mrb[0].mxu0
        %1056 = vmatprep.mubr.f32.mxu0 0.0
        %1057 = vmatmul.mubr.f32.gmra.mrb[0].mxu0 %v898
        %v1058 = vpop.f32.mrb[0].mxu0
        %v1059 = vadd.f32 0.0, %v1058
        %v1060 = vpop.f32.mrb[0].mxu0
        %1061 = vmatprep.mubr.f32.mxu0 0.0
        %1062 = vmatmul.mubr.f32.gmra.mrb[0].mxu0 %v903
        %v1063 = vpop.f32.mrb[0].mxu0
        %v1064 = vadd.f32 0.0, %v1063
        %v1065 = vpop.f32.mrb[0].mxu0
        %1066 = vmatprep.mubr.f32.mxu0 0.0
        %1067 = vmatmul.mubr.f32.gmra.mrb[0].mxu0 %v908
        %v1068 = vpop.f32.mrb[0].mxu0
        %v1069 = vadd.f32 0.0, %v1068
        %v1070 = vpop.f32.mrb[0].mxu0
        %1071 = vmatprep.mubr.f32.mxu0 0.0
        %1072 = vmatmul.mubr.f32.gmra.mrb[0].mxu0 %v913
        %v1073 = vpop.f32.mrb[0].mxu0
        %v1074 = vadd.f32 0.0, %v1073
        %v1075 = vpop.f32.mrb[0].mxu0
        %1076 = vdwg.mxu0
        %v1077 = vld [vmem:[%s304] sm:$0xff]
        %v1078 = vld [vmem:[%s304 + $0x8] sm:$0xff]
        %1079 = vmatprep.subr.mxu0 0.0
        %1080 = vmatpush1.msra.mxu0 %v999
        %1081 = vmatprep.subr.mxu0 0.0
        %1082 = vmatpush1.msra.mxu0 %v1004
        %1083 = vmatprep.subr.mxu0 0.0
        %1084 = vmatpush1.msra.mxu0 %v1009
        %1085 = vmatprep.subr.mxu0 0.0
        %1086 = vmatpush1.msra.mxu0 %v1014
        %1087 = vmatprep.subr.mxu0 0.0
        %1088 = vmatpush1.msra.mxu0 %v1019
        %1089 = vmatprep.subr.mxu0 0.0
        %1090 = vmatpush1.msra.mxu0 %v1024
        %1091 = vmatprep.subr.mxu0 0.0
        %1092 = vmatpush1.msra.mxu0 %v1029
        %1093 = vmatprep.subr.mxu0 0.0
        %1094 = vmatpush1.msra.mxu0 %v1034
        %1095 = vmatprep.subr.mxu0 0.0
        %1096 = vmatpush1.msra.mxu0 %v1039
        %1097 = vmatprep.subr.mxu0 0.0
        %1098 = vmatpush1.msra.mxu0 %v1044
        %1099 = vmatprep.subr.mxu0 0.0
        %1100 = vmatpush1.msra.mxu0 %v1049
        %1101 = vmatprep.subr.mxu0 0.0
        %1102 = vmatpush1.msra.mxu0 %v1054
        %1103 = vmatprep.subr.mxu0 0.0
        %1104 = vmatpush1.msra.mxu0 %v1059
        %1105 = vmatprep.subr.mxu0 0.0
        %1106 = vmatpush1.msra.mxu0 %v1064
        %1107 = vmatprep.subr.mxu0 0.0
        %1108 = vmatpush1.msra.mxu0 %v1069
        %1109 = vmatprep.subr.mxu0 0.0
        %1110 = vmatpush1.msra.mxu0 %v1074
        %1111 = vmatprep.subr.mxu0 0.0
        %1112 = vmatpush1.msra.mxu0 0.0
        %1113 = vmatprep.subr.mxu0 0.0
        %1114 = vmatpush1.msra.mxu0 0.0
        %1115 = vmatprep.subr.mxu0 0.0
        %1116 = vmatpush1.msra.mxu0 0.0
        %1117 = vmatprep.subr.mxu0 0.0
        %1118 = vmatpush1.msra.mxu0 0.0
        %1119 = vmatprep.subr.mxu0 0.0
        %1120 = vmatpush1.msra.mxu0 0.0
        %1121 = vmatprep.subr.mxu0 0.0
        %1122 = vmatpush1.msra.mxu0 0.0
        %1123 = vmatprep.subr.mxu0 0.0
        %1124 = vmatpush1.msra.mxu0 0.0
        %1125 = vmatprep.subr.mxu0 0.0
        %1126 = vmatpush1.msra.mxu0 0.0
        %1127 = vmatprep.subr.mxu0 0.0
        %1128 = vmatpush1.msra.mxu0 0.0
        %1129 = vmatprep.subr.mxu0 0.0
        %1130 = vmatpush1.msra.mxu0 0.0
        %1131 = vmatprep.subr.mxu0 0.0
        %1132 = vmatpush1.msra.mxu0 0.0
        %1133 = vmatprep.subr.mxu0 0.0
        %1134 = vmatpush1.msra.mxu0 0.0
        %1135 = vmatprep.subr.mxu0 0.0
        %1136 = vmatpush1.msra.mxu0 0.0
        %1137 = vmatprep.subr.mxu0 0.0
        %1138 = vmatpush1.msra.mxu0 0.0
        %1139 = vmatprep.subr.mxu0 0.0
        %1140 = vmatpush1.msra.mxu0 0.0
        %1141 = vmatprep.subr.mxu0 0.0
        %1142 = vmatpush1.msra.mxu0 0.0
        %1143 = vmatprep.mubr.f32.mxu0 0.0
        %1144 = vmatmul.mubr.f32.gmra.mrb[0].mxu0 %v1077
        %v1145 = vpop.f32.mrb[0].mxu0
        %v1146 = vadd.f32 0.0, %v1145
        %v1147 = vpop.f32.mrb[0].mxu0
        %1148 = vmatprep.mubr.f32.mxu0 0.0
        %1149 = vmatmul.mubr.f32.gmra.mrb[0].mxu0 %v1078
        %v1150 = vpop.f32.mrb[0].mxu0
        %v1151 = vadd.f32 0.0, %v1150
        %v1152 = vpop.f32.mrb[0].mxu0
        %1153 = vdwg.mxu0
        %1154 = vst [vmem:[%s348] sm:$0xff] %v1146
        %1155 = vst [vmem:[%s348 + $0x8] sm:$0xff] %v1151
        %s1156 = sand.u32 %s154, 1
        %s1157 = scalar_lea.sflag [#allocation4], %s1156
        %s1158 = sand.u32 %s154, 1
        %s1159 = smul.addr %s1158, 16
        %s1160 = scalar_lea.vmem [#allocation11], %s1159
        // Predicated region
        $region61: #{tpu_custom_call.1} parent=39 // pred_check
          %p1161 = pneg %p164
        $region62: #{tpu_custom_call.1} parent=39 // pred_check_branch
          %1163 = sbr.rel (%p1161) target = $region64
        $region63: #{tpu_custom_call.1} parent=39 // pred_region
          %s1164 = smul.u32 2, %s26
          %s1166 = ssub.s32 256, 256
          %1167 = vsyncadd %s1157, %s1166
          %s1168 = smul.addr %s1164, 128
          %s1169 = scalar_lea.hbm %s5, %s1168
          %s1170 = sshll.u32 %s1160, 4
          %s1171 = int_to_ptr.vmem [resolvable:$true] %s1170
          %1176 = dma.vmem_to_hbm [thread:$0]  %s1171, 256, %s1169, %s1157, 128, 128, 8
        $region64: #{tpu_custom_call.1} parent=39 // pred_fallthru
          _
      $region40: #{tpu_custom_call.1} parent=5 // pred_fallthru
        _
      %p1177 = scmp.le.s32.totalorder 2, %s21
      // Predicated region
      $region65: #{tpu_custom_call.1} parent=5 // pred_check
        %p1178 = pneg %p1177
      $region66: #{tpu_custom_call.1} parent=5 // pred_check_branch
        %1180 = sbr.rel (%p1178) target = $region68
      $region67: #{tpu_custom_call.1} parent=5 // pred_region
        %s1181 = ssub.s32 %s21, 2
        // Predicated region
        $region69: #{tpu_custom_call.1} parent=67 // pred_check
          %p1182 = pneg %p170
        $region70: #{tpu_custom_call.1} parent=67 // pred_check_branch
          %1184 = sbr.rel (%p1182) target = $region72
        $region71: #{tpu_custom_call.1} parent=67 // pred_region
          %s1185 = sand.u32 %s155, 1
          %s1186 = scalar_lea.sflag [#allocation4], %s1185
          %s1187 = sand.u32 %s155, 1
          %s1188 = smul.addr %s1187, 16
          %s1189 = scalar_lea.vmem [#allocation11], %s1188
          %1190 = dma.done %s1186, 256
        $region72: #{tpu_custom_call.1} parent=67 // pred_fallthru
          _
      $region68: #{tpu_custom_call.1} parent=5 // pred_fallthru
        _
    $region6: #{tpu_custom_call.1} parent=1 // loop_footer
      %s25 = sadd.s32 1, %s21
    $region7: #{tpu_custom_call.1} parent=1 // loop_footer_branch
      %20 = sbr.rel target = $region3
    $region8: #{tpu_custom_call.1} parent=1 // loop_exit
      _
    %1191 = vsyncpa [#allocation3], 1
    %s1192 = scalar_lea.sflag [#allocation3], 1
    %1193 = vsyncpa %s1192, 1
    %1194 = vsyncpa [#allocation6], 1
    %s1195 = scalar_lea.sflag [#allocation6], 1
    %1196 = vsyncpa %s1195, 1
    %1197 = vsyncpa [#allocation9], 1
    %1198 = vsyncpa [#allocation4], 1
    %s1199 = scalar_lea.sflag [#allocation4], 1
    %1200 = vsyncpa %s1199, 1

</llo_original>
